<compile_context>
chip_gen: v7x
topology: tpu7x:2x2x1
jax: 0.10.0
libtpu: 0.0.40
codegen_flags: <defaults>
</compile_context>

<pallas_src>
import functools

import jax
import jax.numpy as jnp
from jax.experimental import pallas as pl
from jax.experimental.pallas import tpu as pltpu

NEG_SLOPE = 0.1  # LeakyReLU negative slope used by the PyTorch module
_REP_NAMES = ('rep1_1', 'rep1_2', 'rep2_1', 'rep2_2')


# --------------------------------------------------------------------------
# Hardware-derived knobs
# --------------------------------------------------------------------------
def _vmem_limit_bytes():
    try:
        cap = int(pltpu.get_tpu_info().vmem_capacity_bytes)
    except Exception:
        cap = 64 * 1024 * 1024          # conservative (v7x-sized) default
    if not cap:
        cap = 64 * 1024 * 1024
    return int(cap * 3 // 4)            # 96 MiB on v5e/v6e, 48 MiB on v7x


_VMEM_LIMIT = _vmem_limit_bytes()


def _pad128(c):
    return ((c + 127) // 128) * 128


def _pick_tile_rows(H, W, c_in, c_out):
    """Largest row-strip height that divides H and keeps per-step VMEM bounded."""
    budget = _VMEM_LIMIT // 3
    per_row = W * (c_in * 24 + c_out * 12) + 1
    cap = max(1, min(budget // per_row, 64))
    if H >= 16:
        cap = min(cap, max(8, H // 2))   # >=2 strips -> pipelining / 2-TC balance
    th = 1
    for d in range(1, H + 1):
        if H % d == 0 and d <= cap:
            th = d
    if th < 4:                           # degenerate (e.g. prime H): whole frame
        th = H
    return th


def _probe_im2col():
    """Check lane-dim concatenation of 32-channel taps lowers on this build."""
    def k(x_ref, w_ref, o_ref):
        taps = [x_ref[kh:kh + 8, kw:kw + 8, :].reshape(64, 32)
                for kh in range(3) for kw in range(3)]
        patch = jnp.concatenate(taps, axis=-1)                   # (64, 288)
        o_ref[...] = jnp.dot(patch, w_ref[...],
                             preferred_element_type=jnp.float32)

    try:
        out = pl.pallas_call(
            k, out_shape=jax.ShapeDtypeStruct((64, 32), jnp.float32),
        )(jnp.zeros((10, 10, 32), jnp.bfloat16),
          jnp.zeros((288, 32), jnp.bfloat16))
        jax.block_until_ready(out)
        return True
    except Exception:
        return False


_USE_IM2COL = _probe_im2col()


# ==========================================================================
# Path A: whole-network fused kernel (grid over batch, whole frame in VMEM)
# ==========================================================================
def _errn_fused_kernel(x_ref, c1w_ref, c1b_ref, bw_ref, bb_ref, saw_ref,
                       sab_ref, c2w_ref, c2b_ref, uw_ref, ub_ref,
                       o_ref, pad_ref, *, h_img, w_img, c_in, c_feat,
                       n_blocks, use_im2col, cdt):
    H, W, C = h_img, w_img, c_feat

    def lrelu(v):
        return jnp.where(v > 0, v, NEG_SLOPE * v)

    def conv3(src_ref, w_slab, b_row, k_ch):
        """3x3 'same' conv reading a (H+2, W+2, k_ch) zero-ring-padded ref."""
        taps = [src_ref[kh:kh + H, kw:kw + W, :].reshape(H * W, k_ch)
                for kh in range(3) for kw in range(3)]
        if use_im2col and (k_ch % 8 == 0):
            patch = jnp.concatenate(taps, axis=-1)               # (H*W, 9*k_ch)
            acc = jnp.dot(patch, w_slab, preferred_element_type=jnp.float32)
        else:
            acc = jnp.zeros((H * W, w_slab.shape[-1]), jnp.float32)
            for t, p in enumerate(taps):
                acc = acc + jnp.dot(p, w_slab[t * k_ch:(t + 1) * k_ch, :],
                                    preferred_element_type=jnp.float32)
        return acc + b_row                                       # f32 (H*W, cout)

    def to_pad(v):                                               # v: (H*W, C) f32
        pad_ref[1:H + 1, 1:W + 1, :] = v.reshape(H, W, C).astype(cdt)

    # Zero once; the 1-pixel ring is never written -> zero "same" padding.
    pad_ref[...] = jnp.zeros_like(pad_ref)

    # conv_1 directly from the pre-padded input block.
    feat = conv3(x_ref, c1w_ref[...], c1b_ref[...], c_in)        # (H*W, C) f32

    cur = feat
    for b in range(n_blocks):                                    # RepB blocks
        blk_in = cur
        h = blk_in
        for s in range(4):
            to_pad(h)
            h = conv3(pad_ref, bw_ref[4 * b + s], bb_ref[4 * b + s], C)
            if s < 3:
                h = lrelu(h)
        y = h + blk_in                                           # residual
        att = jnp.sum(y * saw_ref[b], axis=-1, keepdims=True) + sab_ref[b]
        cur = y * jax.nn.sigmoid(att)                            # SSA

    # conv_2 + long residual
    to_pad(cur)
    cur = conv3(pad_ref, c2w_ref[...], c2b_ref[...], C) + feat

    # upsampler 3x3 conv (pixel shuffle happens outside)
    to_pad(cur)
    up = conv3(pad_ref, uw_ref[...], ub_ref[...], C)
    o_ref[...] = up.reshape(H, W, up.shape[-1]).astype(o_ref.dtype)


def _full_fusion_fits(H, W, c_in, c_feat, c_up, n_blocks, compute_dtype):
    """Conservative VMEM estimate (lane-padded layouts) for the fused kernel."""
    cs = jnp.dtype(compute_dtype).itemsize
    hw = H * W
    ci, cf, cu, c9 = (_pad128(c_in), _pad128(c_feat), _pad128(c_up),
                      _pad128(9 * c_feat))
    est = (2 * (H + 2) * (W + 2) * ci * cs            # pipelined input block
           + 2 * hw * cu * 4                          # pipelined output block
           + (H + 2) * (W + 2) * cf * cs              # padded activation scratch
           + 8 * hw * cf * 4                          # live f32 temporaries
           + 2 * hw * c9 * cs                         # im2col patches
           + (4 * n_blocks + 2) * 9 * c_feat * cf * cs
           + 9 * c_in * cf * cs + 9 * c_feat * cu * cs)
    return est <= _VMEM_LIMIT // 2


def _errn_fused(x_nhwc, params, *, compute_dtype):
    N, H, W, c_in = x_nhwc.shape
    blocks = params['blocks']
    nb = len(blocks)
    C = params['conv1_w'].shape[-1]
    c_up = params['up_w'].shape[-1]
    cdt = compute_dtype

    def w9(w):   # (3,3,Cin,Cout) -> (9*Cin, Cout); row = (kh*3+kw)*Cin + cin
        return w.reshape(9 * w.shape[2], w.shape[3]).astype(cdt)

    def b_row(b, c):
        return b.reshape(1, c).astype(jnp.float32)

    xpad = jnp.pad(x_nhwc.astype(cdt), ((0, 0), (1, 1), (1, 1), (0, 0)))
    c1w, c1b = w9(params['conv1_w']), b_row(params['conv1_b'], C)
    c2w, c2b = w9(params['conv2_w']), b_row(params['conv2_b'], C)
    uw, ub = w9(params['up_w']), b_row(params['up_b'], c_up)
    bw = jnp.stack([w9(blk[n + '_w']) for blk in blocks for n in _REP_NAMES])
    bb = jnp.stack([b_row(blk[n + '_b'], C)
                    for blk in blocks for n in _REP_NAMES])
    saw = jnp.stack([blk['ssa_w'].reshape(1, C).astype(jnp.float32)
                     for blk in blocks])
    sab = jnp.stack([blk['ssa_b'].reshape(1, 1).astype(jnp.float32)
                     for blk in blocks])

    def const_spec(shape):
        return pl.BlockSpec(shape, lambda n: (0,) * len(shape))

    kernel = functools.partial(
        _errn_fused_kernel, h_img=H, w_img=W, c_in=c_in, c_feat=C,
        n_blocks=nb, use_im2col=_USE_IM2COL, cdt=cdt)

    flops = 2 * N * H * W * (9 * c_in * C + (4 * nb + 1) * 9 * C * C
                             + 9 * C * c_up + (nb + 3) * C)
    bytes_accessed = int(
        xpad.size * xpad.dtype.itemsize
        + (bw.size + c1w.size + c2w.size + uw.size) * jnp.dtype(cdt).itemsize
        + N * H * W * c_up * 4)

    return pl.pallas_call(
        kernel,
        out_shape=jax.ShapeDtypeStruct((N, H, W, c_up), jnp.float32),
        grid=(N,),
        in_specs=[
            pl.BlockSpec((None, H + 2, W + 2, c_in), lambda n: (n, 0, 0, 0)),
            const_spec(c1w.shape), const_spec(c1b.shape),
            const_spec(bw.shape), const_spec(bb.shape),
            const_spec(saw.shape), const_spec(sab.shape),
            const_spec(c2w.shape), const_spec(c2b.shape),
            const_spec(uw.shape), const_spec(ub.shape),
        ],
        out_specs=pl.BlockSpec((None, H, W, c_up), lambda n: (n, 0, 0, 0)),
        scratch_shapes=[pltpu.VMEM((H + 2, W + 2, C), cdt)],
        compiler_params=pltpu.CompilerParams(
            dimension_semantics=("parallel",),
            vmem_limit_bytes=_VMEM_LIMIT),
        cost_estimate=pl.CostEstimate(flops=int(flops),
                                      transcendentals=int(N * H * W * nb),
                                      bytes_accessed=bytes_accessed),
    )(xpad, c1w, c1b, bw, bb, saw, sab, c2w, c2b, uw, ub)


# ==========================================================================
# Path B (fallback for large frames): per-chain fused kernel with row strips,
# manual halo DMA, optional residual / SimpleSpatialAttention epilogue.
# ==========================================================================
def _chain_kernel(*refs, n_stages, acts, add_input_res, has_res, has_ssa,
                  th, halo, h_img, w_img, c_in, use_im2col):
    idx = 0
    x_hbm = refs[idx]; idx += 1
    res_ref = None
    if has_res:
        res_ref = refs[idx]; idx += 1
    w_refs = refs[idx:idx + n_stages]; idx += n_stages
    b_refs = refs[idx:idx + n_stages]; idx += n_stages
    ssa_w_ref = ssa_b_ref = None
    if has_ssa:
        ssa_w_ref, ssa_b_ref = refs[idx], refs[idx + 1]; idx += 2
    o_ref = refs[idx]
    xin_ref, buf_ref, dma_sem = refs[idx + 1], refs[idx + 2], refs[idx + 3]

    n = pl.program_id(0)
    j = pl.program_id(1)
    R = th + 2 * halo
    c_out = o_ref.shape[-1]

    # ---- fetch the (overlapping) input row strip from HBM -----------------
    cp = pltpu.make_async_copy(x_hbm.at[n, pl.ds(j * th, R), :, :],
                               xin_ref, dma_sem.at[0])
    cp.start()

    buf_ref[...] = jnp.zeros_like(buf_ref)
    cp.wait()
    buf_ref[1:R + 1, 1:w_img + 1, :] = xin_ref[...]

    # Row-validity mask: out-of-image halo rows must be forced back to zero
    # between stages to preserve zero-padding semantics across the halo.
    if n_stages > 1:
        s_iota = jax.lax.broadcasted_iota(jnp.int32, (R, 1, 1), 0)
        g = j * th - halo + s_iota
        row_valid = jnp.logical_and(g >= 0, g < h_img)

    def conv_stage(w_ref, b_ref, row_off, nrows):
        taps = [buf_ref[row_off + kh:row_off + kh + nrows, kw:kw + w_img, :]
                .reshape(nrows * w_img, c_in)
                for kh in range(3) for kw in range(3)]
        if use_im2col:
            patch = jnp.concatenate(taps, axis=-1)           # (rows, 9*c_in)
            acc = jnp.dot(patch, w_ref[...],
                          preferred_element_type=jnp.float32)
        else:
            acc = jnp.zeros((nrows * w_img, w_ref.shape[-1]), jnp.float32)
            for t, p in enumerate(taps):
                acc = acc + jnp.dot(p, w_ref[t * c_in:(t + 1) * c_in, :],
                                    preferred_element_type=jnp.float32)
        return acc + b_ref[...]                              # f32, (rows, cout)

    out2 = None
    for s in range(n_stages):
        last = s == n_stages - 1
        row_off = halo if last else 0    # last stage: only the th needed rows
        nrows = th if last else R
        acc = conv_stage(w_refs[s], b_refs[s], row_off, nrows)
        if acts[s]:
            acc = jnp.where(acc > 0, acc, NEG_SLOPE * acc)
        if last:
            out2 = acc                                       # (th*W, c_out) f32
        else:
            v = acc.reshape(R, w_img, c_in)
            v = jnp.where(row_valid, v, 0.0)                 # zero out-of-image
            buf_ref[1:R + 1, 1:w_img + 1, :] = v.astype(buf_ref.dtype)

    # ---- epilogue on the th valid output rows (f32) ------------------------
    if add_input_res:                                        # RepB: out + x
        out2 = out2 + xin_ref[halo:halo + th, :, :].reshape(
            th * w_img, c_out).astype(jnp.float32)
    if has_res:                                              # conv_2 + feature
        out2 = out2 + res_ref[0].reshape(th * w_img, c_out).astype(jnp.float32)
    if has_ssa:                                              # y * sigmoid(1x1(y))
        att = (jnp.sum(out2 * ssa_w_ref[...], axis=-1, keepdims=True)
               + ssa_b_ref[...])
        out2 = out2 * jax.nn.sigmoid(att)

    o_ref[...] = out2.reshape(1, th, w_img, c_out).astype(o_ref.dtype)


def _conv_chain(x_nhwc, weights, biases, acts, *, res=None, ssa=None,
                add_input_res=False, compute_dtype=jnp.bfloat16, out_dtype=None):
    """Fused chain of 3x3 'same' convs with optional residual / SSA epilogue."""
    N, H, W, c_in = x_nhwc.shape
    n_stages = len(weights)
    assert len(biases) == n_stages and len(acts) == n_stages
    assert weights[0].shape[2] == c_in
    for s in range(n_stages - 1):
        assert weights[s].shape[3] == c_in and weights[s + 1].shape[2] == c_in
    c_out = weights[-1].shape[-1]
    if res is not None or add_input_res or ssa is not None:
        assert not acts[-1]
    if add_input_res:
        assert c_out == c_in
    out_dtype = compute_dtype if out_dtype is None else out_dtype

    halo = n_stages                      # 1 halo row per fused conv
    th = _pick_tile_rows(H, W, c_in, c_out)
    n_strips = H // th
    R = th + 2 * halo
    use_im2col = _USE_IM2COL and (c_in % 8 == 0)

    xpad = jnp.pad(x_nhwc.astype(compute_dtype),
                   ((0, 0), (halo, halo), (0, 0), (0, 0)))
    w9 = [w.reshape(9 * w.shape[2], w.shape[3]).astype(compute_dtype)
          for w in weights]
    b2 = [b.reshape(1, -1).astype(jnp.float32) for b in biases]

    args = [xpad]
    in_specs = [pl.BlockSpec(memory_space=pl.ANY)]      # manual halo DMA
    if res is not None:
        args.append(res.astype(compute_dtype))
        in_specs.append(pl.BlockSpec((1, th, W, c_out),
                                     lambda n, j: (n, j, 0, 0)))
    for w in w9:
        args.append(w)
        in_specs.append(pl.BlockSpec(w.shape, lambda n, j: (0, 0)))
    for b in b2:
        args.append(b)
        in_specs.append(pl.BlockSpec(b.shape, lambda n, j: (0, 0)))
    if ssa is not None:
        ssa_w, ssa_b = ssa
        args.append(ssa_w.reshape(1, c_out).astype(jnp.float32))
        in_specs.append(pl.BlockSpec((1, c_out), lambda n, j: (0, 0)))
        args.append(ssa_b.reshape(1, 1).astype(jnp.float32))
        in_specs.append(pl.BlockSpec((1, 1), lambda n, j: (0, 0)))

    kernel = functools.partial(
        _chain_kernel, n_stages=n_stages, acts=tuple(bool(a) for a in acts),
        add_input_res=add_input_res, has_res=res is not None,
        has_ssa=ssa is not None, th=th, halo=halo, h_img=H, w_img=W,
        c_in=c_in, use_im2col=use_im2col)

    flops = 2 * N * H * W * sum(9 * w.shape[2] * w.shape[3] for w in weights)
    bytes_accessed = int(
        xpad.size * xpad.dtype.itemsize
        + sum(w.size * w.dtype.itemsize for w in w9)
        + N * H * W * c_out * jnp.dtype(out_dtype).itemsize
        + (res.size * jnp.dtype(compute_dtype).itemsize if res is not None else 0))
    transcendentals = N * H * W if ssa is not None else 0

    return pl.pallas_call(
        kernel,
        out_shape=jax.ShapeDtypeStruct((N, H, W, c_out), out_dtype),
        grid=(N, n_strips),
        in_specs=in_specs,
        out_specs=pl.BlockSpec((1, th, W, c_out), lambda n, j: (n, j, 0, 0)),
        scratch_shapes=[
            pltpu.VMEM((R, W, c_in), compute_dtype),          # input strip
            pltpu.VMEM((R + 2, W + 2, c_in), compute_dtype),  # padded activations
            pltpu.SemaphoreType.DMA((1,)),
        ],
        compiler_params=pltpu.CompilerParams(
            dimension_semantics=("parallel", "parallel"),
            vmem_limit_bytes=_VMEM_LIMIT),
        cost_estimate=pl.CostEstimate(flops=int(flops),
                                      transcendentals=int(transcendentals),
                                      bytes_accessed=int(bytes_accessed)),
    )(*args)


def conv3x3(x, w, b, *, res=None, act=False,
            compute_dtype=jnp.bfloat16, out_dtype=None):
    return _conv_chain(x, [w], [b], [act], res=res, ssa=None,
                       add_input_res=False, compute_dtype=compute_dtype,
                       out_dtype=out_dtype)


def rep_block(x, p, *, compute_dtype=jnp.bfloat16):
    return _conv_chain(
        x,
        [p[n + '_w'] for n in _REP_NAMES],
        [p[n + '_b'] for n in _REP_NAMES],
        [True, True, True, False],
        ssa=(p['ssa_w'], p['ssa_b']),
        add_input_res=True,
        compute_dtype=compute_dtype)


def pixel_shuffle_nhwc(x, r):
    """PixelShuffle matching torch.nn.PixelShuffle semantics, in NHWC."""
    N, H, W, C = x.shape
    c = C // (r * r)
    x = x.reshape(N, H, W, c, r, r)
    x = jnp.transpose(x, (0, 1, 4, 2, 5, 3))
    return x.reshape(N, H * r, W * r, c)


# --------------------------------------------------------------------------
# ERRN forward (Pallas) and pure-JAX reference
# --------------------------------------------------------------------------
def errn_forward(x_nchw, params, upscale, compute_dtype=jnp.bfloat16):
    x = jnp.transpose(x_nchw, (0, 2, 3, 1))                       # NCHW -> NHWC
    N, H, W, c_in = x.shape
    C = params['conv1_w'].shape[-1]
    c_up = params['up_w'].shape[-1]

    if _full_fusion_fits(H, W, c_in, C, c_up, len(params['blocks']),
                         compute_dtype):
        out = _errn_fused(x, params, compute_dtype=compute_dtype)
    else:
        # Large-frame fallback: per-block fused row-strip kernels.
        feat = conv3x3(x, params['conv1_w'], params['conv1_b'],
                       compute_dtype=compute_dtype)
        out = feat
        for blk in params['blocks']:
            out = rep_block(out, blk, compute_dtype=compute_dtype)
        out = conv3x3(out, params['conv2_w'], params['conv2_b'], res=feat,
                      compute_dtype=compute_dtype)
        out = conv3x3(out, params['up_w'], params['up_b'],
                      compute_dtype=compute_dtype, out_dtype=jnp.float32)

    out = pixel_shuffle_nhwc(out, upscale)
    return jnp.transpose(out, (0, 3, 1, 2)).astype(jnp.float32)   # NHWC -> NCHW


def errn_reference(x_nchw, params, upscale):
    """Pure-JAX (XLA) f32 reference for correctness checking."""
    def conv(v, w, b):
        out = jax.lax.conv_general_dilated(
            v, w.astype(jnp.float32), (1, 1), 'SAME',
            dimension_numbers=('NHWC', 'HWIO', 'NHWC'),
            precision=jax.lax.Precision.HIGHEST)
        return out + b.astype(jnp.float32)

    def lrelu(v):
        return jnp.where(v > 0, v, NEG_SLOPE * v)

    x = jnp.transpose(x_nchw, (0, 2, 3, 1)).astype(jnp.float32)
    feat = conv(x, params['conv1_w'], params['conv1_b'])
    out = feat
    for blk in params['blocks']:
        t = out
        h = lrelu(conv(t, blk['rep1_1_w'], blk['rep1_1_b']))
        h = lrelu(conv(h, blk['rep1_2_w'], blk['rep1_2_b']))
        h = lrelu(conv(h, blk['rep2_1_w'], blk['rep2_1_b']))
        h = conv(h, blk['rep2_2_w'], blk['rep2_2_b'])
        y = h + t
        att = (jnp.sum(y * blk['ssa_w'].reshape(1, 1, 1, -1),
                       axis=-1, keepdims=True) + blk['ssa_b'][0, 0])
        out = y * jax.nn.sigmoid(att)
    out = conv(out, params['conv2_w'], params['conv2_b']) + feat
    out = conv(out, params['up_w'], params['up_b'])
    out = pixel_shuffle_nhwc(out, upscale)
    return jnp.transpose(out, (0, 3, 1, 2))


# --------------------------------------------------------------------------
# Deterministic parameter init (synthetic weights, HWIO conv layout)
# --------------------------------------------------------------------------
def init_params(key, in_ch=3, out_ch=3, feat=32, upscale=2):
    keys = iter(jax.random.split(key, 128))

    def conv_w(cin, cout, k=3):
        scale = 1.0 / (k * k * cin) ** 0.5
        return jax.random.normal(next(keys), (k, k, cin, cout), jnp.float32) * scale

    def bias(cout):
        return jax.random.normal(next(keys), (cout,), jnp.float32) * 0.01

    p = {
        'conv1_w': conv_w(in_ch, feat), 'conv1_b': bias(feat),
        'conv2_w': conv_w(feat, feat), 'conv2_b': bias(feat),
        'up_w': conv_w(feat, out_ch * upscale * upscale),
        'up_b': bias(out_ch * upscale * upscale),
        'blocks': [],
    }
    for _ in range(6):
        blk = {}
        for name in _REP_NAMES:
            blk[name + '_w'] = conv_w(feat, feat)
            blk[name + '_b'] = bias(feat)
        blk['ssa_w'] = (jax.random.normal(next(keys), (1, feat), jnp.float32)
                        * (1.0 / feat ** 0.5))
        blk['ssa_b'] = jax.random.normal(next(keys), (1, 1), jnp.float32) * 0.01
        p['blocks'].append(blk)
    return p


# --------------------------------------------------------------------------
if __name__ == "__main__":
    key = jax.random.PRNGKey(0)
    k_x, k_p = jax.random.split(key)

    N, IN_CH, OUT_CH, H, W = 2, 3, 3, 16, 16
    FEAT, UPSCALE = 32, 2

    x = jax.random.normal(k_x, (N, IN_CH, H, W), jnp.float32)     # NCHW input
    params = init_params(k_p, in_ch=IN_CH, out_ch=OUT_CH, feat=FEAT,
                         upscale=UPSCALE)

    # Pure-JAX reference (f32).
    y_ref = jax.jit(functools.partial(errn_reference, upscale=UPSCALE))(x, params)
    jax.block_until_ready(y_ref)

    # Correctness check of the Pallas kernels in f32 compute mode.
    fwd_f32 = jax.jit(functools.partial(errn_forward, upscale=UPSCALE,
                                        compute_dtype=jnp.float32))
    y_f32 = fwd_f32(x, params)
    jax.block_until_ready(y_f32)
    scale = float(jnp.max(jnp.abs(y_ref)))
    max_err = float(jnp.max(jnp.abs(y_f32 - y_ref)))
    assert max_err <= 5e-2 * max(scale, 1.0), (max_err, scale)

    # Production path: bf16 operands on the MXU, f32 accumulation.
    fwd = jax.jit(functools.partial(errn_forward, upscale=UPSCALE,
                                    compute_dtype=jnp.bfloat16))
    y = fwd(x, params)
    jax.block_until_ready(y)

    assert y.shape == (N, OUT_CH, H * UPSCALE, W * UPSCALE), y.shape
    assert bool(jnp.all(jnp.isfinite(y)))
    print("KERNEL_OK")
</pallas_src>

<mosaic_0001>
module attributes {stable_mosaic.version = 11 : i64} {
  func.func @k(%arg0: memref<10x10x32xbf16, #tpu.memory_space<vmem>>, %arg1: memref<288x32xbf16, #tpu.memory_space<vmem>>, %arg2: memref<64x32xf32, #tpu.memory_space<vmem>>) attributes {dimension_semantics = [], scalar_prefetch = 0 : i64, scratch_operands = 0 : i64, tpu.core_type = #tpu.core_type<tc>} {
    %c0 = arith.constant 0 : index
    %c0_0 = arith.constant 0 : index
    %c0_1 = arith.constant 0 : index
    %0 = vector.load %arg0[%c0, %c0_0, %c0_1] : memref<10x10x32xbf16, #tpu.memory_space<vmem>>, vector<8x8x32xbf16>
    %1 = vector.shape_cast %0 : vector<8x8x32xbf16> to vector<64x32xbf16>
    %c0_2 = arith.constant 0 : index
    %c1 = arith.constant 1 : index
    %c0_3 = arith.constant 0 : index
    %2 = vector.load %arg0[%c0_2, %c1, %c0_3] : memref<10x10x32xbf16, #tpu.memory_space<vmem>>, vector<8x8x32xbf16>
    %3 = vector.shape_cast %2 : vector<8x8x32xbf16> to vector<64x32xbf16>
    %c0_4 = arith.constant 0 : index
    %c2 = arith.constant 2 : index
    %c0_5 = arith.constant 0 : index
    %4 = vector.load %arg0[%c0_4, %c2, %c0_5] : memref<10x10x32xbf16, #tpu.memory_space<vmem>>, vector<8x8x32xbf16>
    %5 = vector.shape_cast %4 : vector<8x8x32xbf16> to vector<64x32xbf16>
    %c1_6 = arith.constant 1 : index
    %c0_7 = arith.constant 0 : index
    %c0_8 = arith.constant 0 : index
    %6 = vector.load %arg0[%c1_6, %c0_7, %c0_8] : memref<10x10x32xbf16, #tpu.memory_space<vmem>>, vector<8x8x32xbf16>
    %7 = vector.shape_cast %6 : vector<8x8x32xbf16> to vector<64x32xbf16>
    %c1_9 = arith.constant 1 : index
    %c1_10 = arith.constant 1 : index
    %c0_11 = arith.constant 0 : index
    %8 = vector.load %arg0[%c1_9, %c1_10, %c0_11] : memref<10x10x32xbf16, #tpu.memory_space<vmem>>, vector<8x8x32xbf16>
    %9 = vector.shape_cast %8 : vector<8x8x32xbf16> to vector<64x32xbf16>
    %c1_12 = arith.constant 1 : index
    %c2_13 = arith.constant 2 : index
    %c0_14 = arith.constant 0 : index
    %10 = vector.load %arg0[%c1_12, %c2_13, %c0_14] : memref<10x10x32xbf16, #tpu.memory_space<vmem>>, vector<8x8x32xbf16>
    %11 = vector.shape_cast %10 : vector<8x8x32xbf16> to vector<64x32xbf16>
    %c2_15 = arith.constant 2 : index
    %c0_16 = arith.constant 0 : index
    %c0_17 = arith.constant 0 : index
    %12 = vector.load %arg0[%c2_15, %c0_16, %c0_17] : memref<10x10x32xbf16, #tpu.memory_space<vmem>>, vector<8x8x32xbf16>
    %13 = vector.shape_cast %12 : vector<8x8x32xbf16> to vector<64x32xbf16>
    %c2_18 = arith.constant 2 : index
    %c1_19 = arith.constant 1 : index
    %c0_20 = arith.constant 0 : index
    %14 = vector.load %arg0[%c2_18, %c1_19, %c0_20] : memref<10x10x32xbf16, #tpu.memory_space<vmem>>, vector<8x8x32xbf16>
    %15 = vector.shape_cast %14 : vector<8x8x32xbf16> to vector<64x32xbf16>
    %c2_21 = arith.constant 2 : index
    %c2_22 = arith.constant 2 : index
    %c0_23 = arith.constant 0 : index
    %16 = vector.load %arg0[%c2_21, %c2_22, %c0_23] : memref<10x10x32xbf16, #tpu.memory_space<vmem>>, vector<8x8x32xbf16>
    %17 = vector.shape_cast %16 : vector<8x8x32xbf16> to vector<64x32xbf16>
    %18 = tpu.concatenate %1, %3, %5, %7, %9, %11, %13, %15, %17 in 1 : vector<64x32xbf16>, vector<64x32xbf16>, vector<64x32xbf16>, vector<64x32xbf16>, vector<64x32xbf16>, vector<64x32xbf16>, vector<64x32xbf16>, vector<64x32xbf16>, vector<64x32xbf16> -> vector<64x288xbf16>
    %c0_24 = arith.constant 0 : index
    %c0_25 = arith.constant 0 : index
    %19 = vector.load %arg1[%c0_24, %c0_25] : memref<288x32xbf16, #tpu.memory_space<vmem>>, vector<288x32xbf16>
    %cst = arith.constant dense<0.000000e+00> : vector<64x32xf32>
    %20 = tpu.matmul %18, %19, %cst {dimension_numbers = #tpu.dot_dimension_numbers<[1], [0], [0], [1], [0, 0, 1, 1], [], []>} : vector<64x288xbf16>, vector<288x32xbf16>, vector<64x32xf32> -> vector<64x32xf32>
    %c0_26 = arith.constant 0 : index
    %c0_27 = arith.constant 0 : index
    %21 = vector.load %arg2[%c0_26, %c0_27] : memref<64x32xf32, #tpu.memory_space<vmem>>, vector<64x32xf32>
    tpu.vector_store %arg2[%c0_26, %c0_27], %20 {strides = array<i32>} : memref<64x32xf32, #tpu.memory_space<vmem>>, vector<64x32xf32>,
    return
  }
}

</mosaic_0001>

<llo_original>
// kernel: tpu_custom_call.1
$region0: #{tpu_custom_call.1}
  #allocation0 [shape = 'u32[]', space=smem, size = 0x4, offset = 0x4, fixed_abs, tag = 'smem constant byte address 0x4 - core index']
  #allocation1 [shape = 'u32[144,128]{1,0:T(1,128)}', space=vmem, size = 0x12000, scoped, tag = 'internal scratch']
  %s0 = inlined_call_operand.vmem [shape: bf16[10,10,32], index: 0, kind: input, shape index: {}]
  %s1 = inlined_call_operand.vmem [shape: bf16[288,32], index: 1, kind: input, shape index: {}]
  %s2 = inlined_call_operand.vmem [shape: f32[64,32], index: 2, kind: output, shape index: {}]
  %s3 = sld [smem:[#allocation0]]
  $region18: #{tpu_custom_call.1} parent=0
    _
  %s5 = ssub.s32 1, %s3
  %s6 = scalar_select 0, %s5, %s3
  // Predicated region
  $region2: #{tpu_custom_call.1} parent=0 // pred_check
    _
  $region3: #{tpu_custom_call.1} parent=0 // pred_check_branch
    %8 = sbr.rel (0) target = $region5
  $region4: #{tpu_custom_call.1} parent=0 // pred_region
    _
  $region5: #{tpu_custom_call.1} parent=0 // pred_fallthru
    _
  // Predicated region
  $region6: #{tpu_custom_call.1} parent=0 // pred_check
    _
  $region7: #{tpu_custom_call.1} parent=0 // pred_check_branch
    %10 = sbr.rel (0) target = $region9
  $region8: #{tpu_custom_call.1} parent=0 // pred_region
    _
  $region9: #{tpu_custom_call.1} parent=0 // pred_fallthru
    _
  %v12 = vld [vmem:[%s0] sm:$0xf]
  %v13 = vld [vmem:[%s0 + $0x8] sm:$0xf]
  %v14 = vld [vmem:[%s0 + $0x10] sm:$0xf]
  %v15 = vld [vmem:[%s0 + $0x18] sm:$0xf]
  %v16 = vld [vmem:[%s0 + $0x20] sm:$0xf]
  %v17 = vld [vmem:[%s0 + $0x28] sm:$0xf]
  %v18 = vld [vmem:[%s0 + $0x30] sm:$0xf]
  %v19 = vld [vmem:[%s0 + $0x38] sm:$0xf]
  %v20 = vld [vmem:[%s0 + $0x4] sm:$0x1]
  %v21 = vld [vmem:[%s0 + $0xc] sm:$0x1]
  %v22 = vld [vmem:[%s0 + $0x14] sm:$0x1]
  %v23 = vld [vmem:[%s0 + $0x1c] sm:$0x1]
  %v24 = vld [vmem:[%s0 + $0x24] sm:$0x1]
  %v25 = vld [vmem:[%s0 + $0x2c] sm:$0x1]
  %v26 = vld [vmem:[%s0 + $0x34] sm:$0x1]
  %v27 = vld [vmem:[%s0 + $0x3c] sm:$0x1]
  %vm28 = vsmask.f32 3328
  %vm29 = vsmask.f32 7440
  %vm30 = vmor %vm28, %vm29
  %v32 = vshrl.u32 %v12, 16
  %v34 = vrot.slane %v32, 4
  %v35 = vshll.u32 %v12, 16
  %v37 = vrot.slane %v35, 5
  %v38 = vor.u32 %v34, %v37
  %v39 = vrot.slane %v38, 4
  %v41 = vshll.u32 %v20, 16
  %v43 = vrot.slane %v41, 5
  %v44 = vsel %vm30, %v39, %v43
  %v46 = vshrl.u32 %v13, 16
  %v48 = vrot.slane %v46, 4
  %v49 = vshll.u32 %v13, 16
  %v51 = vrot.slane %v49, 5
  %v52 = vor.u32 %v48, %v51
  %v53 = vrot.slane %v52, 4
  %v55 = vshll.u32 %v21, 16
  %v57 = vrot.slane %v55, 5
  %v58 = vsel %vm30, %v53, %v57
  %v60 = vshrl.u32 %v14, 16
  %v62 = vrot.slane %v60, 4
  %v63 = vshll.u32 %v14, 16
  %v65 = vrot.slane %v63, 5
  %v66 = vor.u32 %v62, %v65
  %v67 = vrot.slane %v66, 4
  %v69 = vshll.u32 %v22, 16
  %v71 = vrot.slane %v69, 5
  %v72 = vsel %vm30, %v67, %v71
  %v74 = vshrl.u32 %v15, 16
  %v76 = vrot.slane %v74, 4
  %v77 = vshll.u32 %v15, 16
  %v79 = vrot.slane %v77, 5
  %v80 = vor.u32 %v76, %v79
  %v81 = vrot.slane %v80, 4
  %v83 = vshll.u32 %v23, 16
  %v85 = vrot.slane %v83, 5
  %v86 = vsel %vm30, %v81, %v85
  %v88 = vshrl.u32 %v16, 16
  %v90 = vrot.slane %v88, 4
  %v91 = vshll.u32 %v16, 16
  %v93 = vrot.slane %v91, 5
  %v94 = vor.u32 %v90, %v93
  %v95 = vrot.slane %v94, 4
  %v97 = vshll.u32 %v24, 16
  %v99 = vrot.slane %v97, 5
  %v100 = vsel %vm30, %v95, %v99
  %v102 = vshrl.u32 %v17, 16
  %v104 = vrot.slane %v102, 4
  %v105 = vshll.u32 %v17, 16
  %v107 = vrot.slane %v105, 5
  %v108 = vor.u32 %v104, %v107
  %v109 = vrot.slane %v108, 4
  %v111 = vshll.u32 %v25, 16
  %v113 = vrot.slane %v111, 5
  %v114 = vsel %vm30, %v109, %v113
  %v116 = vshrl.u32 %v18, 16
  %v118 = vrot.slane %v116, 4
  %v119 = vshll.u32 %v18, 16
  %v121 = vrot.slane %v119, 5
  %v122 = vor.u32 %v118, %v121
  %v123 = vrot.slane %v122, 4
  %v125 = vshll.u32 %v26, 16
  %v127 = vrot.slane %v125, 5
  %v128 = vsel %vm30, %v123, %v127
  %v130 = vshrl.u32 %v19, 16
  %v132 = vrot.slane %v130, 4
  %v133 = vshll.u32 %v19, 16
  %v135 = vrot.slane %v133, 5
  %v136 = vor.u32 %v132, %v135
  %v137 = vrot.slane %v136, 4
  %v139 = vshll.u32 %v27, 16
  %v141 = vrot.slane %v139, 5
  %v142 = vsel %vm30, %v137, %v141
  %v143 = vld [vmem:[%s0] sm:$0xe]
  %v144 = vld [vmem:[%s0 + $0x8] sm:$0xe]
  %v145 = vld [vmem:[%s0 + $0x10] sm:$0xe]
  %v146 = vld [vmem:[%s0 + $0x18] sm:$0xe]
  %v147 = vld [vmem:[%s0 + $0x20] sm:$0xe]
  %v148 = vld [vmem:[%s0 + $0x28] sm:$0xe]
  %v149 = vld [vmem:[%s0 + $0x30] sm:$0xe]
  %v150 = vld [vmem:[%s0 + $0x38] sm:$0xe]
  %vm167 = vcmask 1042432
  %vm168 = vcmask 1046532
  %vm169 = vmor %vm167, %vm168
  %v170 = vrot.slane %v143, 5
  %v171 = vrot.slane %v170, 4
  %v172 = vrot.slane %v20, 5
  %v173 = vsel %vm169, %v171, %v172
  %v174 = vrot.slane %v144, 5
  %v175 = vrot.slane %v174, 4
  %v176 = vrot.slane %v21, 5
  %v177 = vsel %vm169, %v175, %v176
  %v178 = vrot.slane %v145, 5
  %v179 = vrot.slane %v178, 4
  %v180 = vrot.slane %v22, 5
  %v181 = vsel %vm169, %v179, %v180
  %v182 = vrot.slane %v146, 5
  %v183 = vrot.slane %v182, 4
  %v184 = vrot.slane %v23, 5
  %v185 = vsel %vm169, %v183, %v184
  %v186 = vrot.slane %v147, 5
  %v187 = vrot.slane %v186, 4
  %v188 = vrot.slane %v24, 5
  %v189 = vsel %vm169, %v187, %v188
  %v190 = vrot.slane %v148, 5
  %v191 = vrot.slane %v190, 4
  %v192 = vrot.slane %v25, 5
  %v193 = vsel %vm169, %v191, %v192
  %v194 = vrot.slane %v149, 5
  %v195 = vrot.slane %v194, 4
  %v196 = vrot.slane %v26, 5
  %v197 = vsel %vm169, %v195, %v196
  %v198 = vrot.slane %v150, 5
  %v199 = vrot.slane %v198, 4
  %v200 = vrot.slane %v27, 5
  %v201 = vsel %vm169, %v199, %v200
  %s202 = scalar_lea.vmem %s0, 8
  %v203 = vld [vmem:[%s202] sm:$0xf]
  %v204 = vld [vmem:[%s202 + $0x8] sm:$0xf]
  %v205 = vld [vmem:[%s202 + $0x10] sm:$0xf]
  %v206 = vld [vmem:[%s202 + $0x18] sm:$0xf]
  %v207 = vld [vmem:[%s202 + $0x20] sm:$0xf]
  %v208 = vld [vmem:[%s202 + $0x28] sm:$0xf]
  %v209 = vld [vmem:[%s202 + $0x30] sm:$0xf]
  %v210 = vld [vmem:[%s202 + $0x38] sm:$0xf]
  %v211 = vld [vmem:[%s202 + $0x4] sm:$0x1]
  %v212 = vld [vmem:[%s202 + $0xc] sm:$0x1]
  %v213 = vld [vmem:[%s202 + $0x14] sm:$0x1]
  %v214 = vld [vmem:[%s202 + $0x1c] sm:$0x1]
  %v215 = vld [vmem:[%s202 + $0x24] sm:$0x1]
  %v216 = vld [vmem:[%s202 + $0x2c] sm:$0x1]
  %v217 = vld [vmem:[%s202 + $0x34] sm:$0x1]
  %v218 = vld [vmem:[%s202 + $0x3c] sm:$0x1]
  %v220 = vshrl.u32 %v203, 16
  %v222 = vrot.slane %v220, 4
  %v223 = vshll.u32 %v203, 16
  %v225 = vrot.slane %v223, 5
  %v226 = vor.u32 %v222, %v225
  %v227 = vrot.slane %v226, 4
  %v229 = vshll.u32 %v211, 16
  %v231 = vrot.slane %v229, 5
  %v232 = vsel %vm30, %v227, %v231
  %v234 = vshrl.u32 %v204, 16
  %v236 = vrot.slane %v234, 4
  %v237 = vshll.u32 %v204, 16
  %v239 = vrot.slane %v237, 5
  %v240 = vor.u32 %v236, %v239
  %v241 = vrot.slane %v240, 4
  %v243 = vshll.u32 %v212, 16
  %v245 = vrot.slane %v243, 5
  %v246 = vsel %vm30, %v241, %v245
  %v248 = vshrl.u32 %v205, 16
  %v250 = vrot.slane %v248, 4
  %v251 = vshll.u32 %v205, 16
  %v253 = vrot.slane %v251, 5
  %v254 = vor.u32 %v250, %v253
  %v255 = vrot.slane %v254, 4
  %v257 = vshll.u32 %v213, 16
  %v259 = vrot.slane %v257, 5
  %v260 = vsel %vm30, %v255, %v259
  %v262 = vshrl.u32 %v206, 16
  %v264 = vrot.slane %v262, 4
  %v265 = vshll.u32 %v206, 16
  %v267 = vrot.slane %v265, 5
  %v268 = vor.u32 %v264, %v267
  %v269 = vrot.slane %v268, 4
  %v271 = vshll.u32 %v214, 16
  %v273 = vrot.slane %v271, 5
  %v274 = vsel %vm30, %v269, %v273
  %v276 = vshrl.u32 %v207, 16
  %v278 = vrot.slane %v276, 4
  %v279 = vshll.u32 %v207, 16
  %v281 = vrot.slane %v279, 5
  %v282 = vor.u32 %v278, %v281
  %v283 = vrot.slane %v282, 4
  %v285 = vshll.u32 %v215, 16
  %v287 = vrot.slane %v285, 5
  %v288 = vsel %vm30, %v283, %v287
  %v290 = vshrl.u32 %v208, 16
  %v292 = vrot.slane %v290, 4
  %v293 = vshll.u32 %v208, 16
  %v295 = vrot.slane %v293, 5
  %v296 = vor.u32 %v292, %v295
  %v297 = vrot.slane %v296, 4
  %v299 = vshll.u32 %v216, 16
  %v301 = vrot.slane %v299, 5
  %v302 = vsel %vm30, %v297, %v301
  %v304 = vshrl.u32 %v209, 16
  %v306 = vrot.slane %v304, 4
  %v307 = vshll.u32 %v209, 16
  %v309 = vrot.slane %v307, 5
  %v310 = vor.u32 %v306, %v309
  %v311 = vrot.slane %v310, 4
  %v313 = vshll.u32 %v217, 16
  %v315 = vrot.slane %v313, 5
  %v316 = vsel %vm30, %v311, %v315
  %v318 = vshrl.u32 %v210, 16
  %v320 = vrot.slane %v318, 4
  %v321 = vshll.u32 %v210, 16
  %v323 = vrot.slane %v321, 5
  %v324 = vor.u32 %v320, %v323
  %v325 = vrot.slane %v324, 4
  %v327 = vshll.u32 %v218, 16
  %v329 = vrot.slane %v327, 5
  %v330 = vsel %vm30, %v325, %v329
  %v331 = vld [vmem:[%s202] sm:$0xe]
  %v332 = vld [vmem:[%s202 + $0x8] sm:$0xe]
  %v333 = vld [vmem:[%s202 + $0x10] sm:$0xe]
  %v334 = vld [vmem:[%s202 + $0x18] sm:$0xe]
  %v335 = vld [vmem:[%s202 + $0x20] sm:$0xe]
  %v336 = vld [vmem:[%s202 + $0x28] sm:$0xe]
  %v337 = vld [vmem:[%s202 + $0x30] sm:$0xe]
  %v338 = vld [vmem:[%s202 + $0x38] sm:$0xe]
  %v355 = vrot.slane %v331, 5
  %v356 = vrot.slane %v355, 4
  %v357 = vrot.slane %v211, 5
  %v358 = vsel %vm169, %v356, %v357
  %v359 = vrot.slane %v332, 5
  %v360 = vrot.slane %v359, 4
  %v361 = vrot.slane %v212, 5
  %v362 = vsel %vm169, %v360, %v361
  %v363 = vrot.slane %v333, 5
  %v364 = vrot.slane %v363, 4
  %v365 = vrot.slane %v213, 5
  %v366 = vsel %vm169, %v364, %v365
  %v367 = vrot.slane %v334, 5
  %v368 = vrot.slane %v367, 4
  %v369 = vrot.slane %v214, 5
  %v370 = vsel %vm169, %v368, %v369
  %v371 = vrot.slane %v335, 5
  %v372 = vrot.slane %v371, 4
  %v373 = vrot.slane %v215, 5
  %v374 = vsel %vm169, %v372, %v373
  %v375 = vrot.slane %v336, 5
  %v376 = vrot.slane %v375, 4
  %v377 = vrot.slane %v216, 5
  %v378 = vsel %vm169, %v376, %v377
  %v379 = vrot.slane %v337, 5
  %v380 = vrot.slane %v379, 4
  %v381 = vrot.slane %v217, 5
  %v382 = vsel %vm169, %v380, %v381
  %v383 = vrot.slane %v338, 5
  %v384 = vrot.slane %v383, 4
  %v385 = vrot.slane %v218, 5
  %v386 = vsel %vm169, %v384, %v385
  %s387 = scalar_lea.vmem %s0, 16
  %v388 = vld [vmem:[%s387] sm:$0xf]
  %v389 = vld [vmem:[%s387 + $0x8] sm:$0xf]
  %v390 = vld [vmem:[%s387 + $0x10] sm:$0xf]
  %v391 = vld [vmem:[%s387 + $0x18] sm:$0xf]
  %v392 = vld [vmem:[%s387 + $0x20] sm:$0xf]
  %v393 = vld [vmem:[%s387 + $0x28] sm:$0xf]
  %v394 = vld [vmem:[%s387 + $0x30] sm:$0xf]
  %v395 = vld [vmem:[%s387 + $0x38] sm:$0xf]
  %v396 = vld [vmem:[%s387 + $0x4] sm:$0x1]
  %v397 = vld [vmem:[%s387 + $0xc] sm:$0x1]
  %v398 = vld [vmem:[%s387 + $0x14] sm:$0x1]
  %v399 = vld [vmem:[%s387 + $0x1c] sm:$0x1]
  %v400 = vld [vmem:[%s387 + $0x24] sm:$0x1]
  %v401 = vld [vmem:[%s387 + $0x2c] sm:$0x1]
  %v402 = vld [vmem:[%s387 + $0x34] sm:$0x1]
  %v403 = vld [vmem:[%s387 + $0x3c] sm:$0x1]
  %v405 = vshrl.u32 %v388, 16
  %v407 = vrot.slane %v405, 4
  %v408 = vshll.u32 %v388, 16
  %v410 = vrot.slane %v408, 5
  %v411 = vor.u32 %v407, %v410
  %v412 = vrot.slane %v411, 4
  %v414 = vshll.u32 %v396, 16
  %v416 = vrot.slane %v414, 5
  %v417 = vsel %vm30, %v412, %v416
  %v419 = vshrl.u32 %v389, 16
  %v421 = vrot.slane %v419, 4
  %v422 = vshll.u32 %v389, 16
  %v424 = vrot.slane %v422, 5
  %v425 = vor.u32 %v421, %v424
  %v426 = vrot.slane %v425, 4
  %v428 = vshll.u32 %v397, 16
  %v430 = vrot.slane %v428, 5
  %v431 = vsel %vm30, %v426, %v430
  %v433 = vshrl.u32 %v390, 16
  %v435 = vrot.slane %v433, 4
  %v436 = vshll.u32 %v390, 16
  %v438 = vrot.slane %v436, 5
  %v439 = vor.u32 %v435, %v438
  %v440 = vrot.slane %v439, 4
  %v442 = vshll.u32 %v398, 16
  %v444 = vrot.slane %v442, 5
  %v445 = vsel %vm30, %v440, %v444
  %v447 = vshrl.u32 %v391, 16
  %v449 = vrot.slane %v447, 4
  %v450 = vshll.u32 %v391, 16
  %v452 = vrot.slane %v450, 5
  %v453 = vor.u32 %v449, %v452
  %v454 = vrot.slane %v453, 4
  %v456 = vshll.u32 %v399, 16
  %v458 = vrot.slane %v456, 5
  %v459 = vsel %vm30, %v454, %v458
  %v461 = vshrl.u32 %v392, 16
  %v463 = vrot.slane %v461, 4
  %v464 = vshll.u32 %v392, 16
  %v466 = vrot.slane %v464, 5
  %v467 = vor.u32 %v463, %v466
  %v468 = vrot.slane %v467, 4
  %v470 = vshll.u32 %v400, 16
  %v472 = vrot.slane %v470, 5
  %v473 = vsel %vm30, %v468, %v472
  %v475 = vshrl.u32 %v393, 16
  %v477 = vrot.slane %v475, 4
  %v478 = vshll.u32 %v393, 16
  %v480 = vrot.slane %v478, 5
  %v481 = vor.u32 %v477, %v480
  %v482 = vrot.slane %v481, 4
  %v484 = vshll.u32 %v401, 16
  %v486 = vrot.slane %v484, 5
  %v487 = vsel %vm30, %v482, %v486
  %v489 = vshrl.u32 %v394, 16
  %v491 = vrot.slane %v489, 4
  %v492 = vshll.u32 %v394, 16
  %v494 = vrot.slane %v492, 5
  %v495 = vor.u32 %v491, %v494
  %v496 = vrot.slane %v495, 4
  %v498 = vshll.u32 %v402, 16
  %v500 = vrot.slane %v498, 5
  %v501 = vsel %vm30, %v496, %v500
  %v503 = vshrl.u32 %v395, 16
  %v505 = vrot.slane %v503, 4
  %v506 = vshll.u32 %v395, 16
  %v508 = vrot.slane %v506, 5
  %v509 = vor.u32 %v505, %v508
  %v510 = vrot.slane %v509, 4
  %v512 = vshll.u32 %v403, 16
  %v514 = vrot.slane %v512, 5
  %v515 = vsel %vm30, %v510, %v514
  %v516 = vld [vmem:[%s387] sm:$0xe]
  %v517 = vld [vmem:[%s387 + $0x8] sm:$0xe]
  %v518 = vld [vmem:[%s387 + $0x10] sm:$0xe]
  %v519 = vld [vmem:[%s387 + $0x18] sm:$0xe]
  %v520 = vld [vmem:[%s387 + $0x20] sm:$0xe]
  %v521 = vld [vmem:[%s387 + $0x28] sm:$0xe]
  %v522 = vld [vmem:[%s387 + $0x30] sm:$0xe]
  %v523 = vld [vmem:[%s387 + $0x38] sm:$0xe]
  %v540 = vrot.slane %v516, 5
  %v541 = vrot.slane %v540, 4
  %v542 = vrot.slane %v396, 5
  %v543 = vsel %vm169, %v541, %v542
  %v544 = vrot.slane %v517, 5
  %v545 = vrot.slane %v544, 4
  %v546 = vrot.slane %v397, 5
  %v547 = vsel %vm169, %v545, %v546
  %v548 = vrot.slane %v518, 5
  %v549 = vrot.slane %v548, 4
  %v550 = vrot.slane %v398, 5
  %v551 = vsel %vm169, %v549, %v550
  %v552 = vrot.slane %v519, 5
  %v553 = vrot.slane %v552, 4
  %v554 = vrot.slane %v399, 5
  %v555 = vsel %vm169, %v553, %v554
  %v556 = vrot.slane %v520, 5
  %v557 = vrot.slane %v556, 4
  %v558 = vrot.slane %v400, 5
  %v559 = vsel %vm169, %v557, %v558
  %v560 = vrot.slane %v521, 5
  %v561 = vrot.slane %v560, 4
  %v562 = vrot.slane %v401, 5
  %v563 = vsel %vm169, %v561, %v562
  %v564 = vrot.slane %v522, 5
  %v565 = vrot.slane %v564, 4
  %v566 = vrot.slane %v402, 5
  %v567 = vsel %vm169, %v565, %v566
  %v568 = vrot.slane %v523, 5
  %v569 = vrot.slane %v568, 4
  %v570 = vrot.slane %v403, 5
  %v571 = vsel %vm169, %v569, %v570
  %v580 = vunpack.c.l.b16 %v12
  %v581 = vunpack.c.l.b16 %v13
  %v582 = vunpack.c.l.b16 %v14
  %v583 = vunpack.c.l.b16 %v15
  %v584 = vunpack.c.l.b16 %v16
  %v585 = vunpack.c.l.b16 %v17
  %v586 = vunpack.c.l.b16 %v18
  %v587 = vunpack.c.l.b16 %v19
  %v588 = vpack.c.b16 %v581, %v580
  %v589 = vpack.c.b16 %v583, %v582
  %v590 = vpack.c.b16 %v585, %v584
  %v591 = vpack.c.b16 %v587, %v586
  %v592 = vunpack.c.l.b16 %v44
  %v593 = vunpack.c.l.b16 %v58
  %v594 = vunpack.c.l.b16 %v72
  %v595 = vunpack.c.l.b16 %v86
  %v596 = vunpack.c.l.b16 %v100
  %v597 = vunpack.c.l.b16 %v114
  %v598 = vunpack.c.l.b16 %v128
  %v599 = vunpack.c.l.b16 %v142
  %v600 = vpack.c.b16 %v593, %v592
  %v601 = vpack.c.b16 %v595, %v594
  %v602 = vpack.c.b16 %v597, %v596
  %v603 = vpack.c.b16 %v599, %v598
  %604 = vrot.lane.b32.xlu0 %v600, 32
  %v605 = vpop.permute.xlu0 %604
  %606 = vrot.lane.b32.xlu0 %v601, 32
  %v607 = vpop.permute.xlu0 %606
  %608 = vrot.lane.b32.xlu0 %v602, 32
  %v609 = vpop.permute.xlu0 %608
  %610 = vrot.lane.b32.xlu0 %v603, 32
  %v611 = vpop.permute.xlu0 %610
  %v612 = vunpack.c.l.b16 %v173
  %v613 = vunpack.c.l.b16 %v177
  %v614 = vunpack.c.l.b16 %v181
  %v615 = vunpack.c.l.b16 %v185
  %v616 = vunpack.c.l.b16 %v189
  %v617 = vunpack.c.l.b16 %v193
  %v618 = vunpack.c.l.b16 %v197
  %v619 = vunpack.c.l.b16 %v201
  %v620 = vpack.c.b16 %v613, %v612
  %v621 = vpack.c.b16 %v615, %v614
  %v622 = vpack.c.b16 %v617, %v616
  %v623 = vpack.c.b16 %v619, %v618
  %624 = vrot.lane.b32.xlu0 %v620, 64
  %v625 = vpop.permute.xlu0 %624
  %626 = vrot.lane.b32.xlu0 %v621, 64
  %v627 = vpop.permute.xlu0 %626
  %628 = vrot.lane.b32.xlu0 %v622, 64
  %v629 = vpop.permute.xlu0 %628
  %630 = vrot.lane.b32.xlu0 %v623, 64
  %v631 = vpop.permute.xlu0 %630
  %v640 = vunpack.c.l.b16 %v203
  %v641 = vunpack.c.l.b16 %v204
  %v642 = vunpack.c.l.b16 %v205
  %v643 = vunpack.c.l.b16 %v206
  %v644 = vunpack.c.l.b16 %v207
  %v645 = vunpack.c.l.b16 %v208
  %v646 = vunpack.c.l.b16 %v209
  %v647 = vunpack.c.l.b16 %v210
  %v648 = vpack.c.b16 %v641, %v640
  %v649 = vpack.c.b16 %v643, %v642
  %v650 = vpack.c.b16 %v645, %v644
  %v651 = vpack.c.b16 %v647, %v646
  %652 = vrot.lane.b32.xlu0 %v648, 96
  %v653 = vpop.permute.xlu0 %652
  %654 = vrot.lane.b32.xlu0 %v649, 96
  %v655 = vpop.permute.xlu0 %654
  %656 = vrot.lane.b32.xlu0 %v650, 96
  %v657 = vpop.permute.xlu0 %656
  %658 = vrot.lane.b32.xlu0 %v651, 96
  %v659 = vpop.permute.xlu0 %658
  %v660 = vunpack.c.l.b16 %v232
  %v661 = vunpack.c.l.b16 %v246
  %v662 = vunpack.c.l.b16 %v260
  %v663 = vunpack.c.l.b16 %v274
  %v664 = vunpack.c.l.b16 %v288
  %v665 = vunpack.c.l.b16 %v302
  %v666 = vunpack.c.l.b16 %v316
  %v667 = vunpack.c.l.b16 %v330
  %v668 = vpack.c.b16 %v661, %v660
  %v669 = vpack.c.b16 %v663, %v662
  %v670 = vpack.c.b16 %v665, %v664
  %v671 = vpack.c.b16 %v667, %v666
  %v672 = vunpack.c.l.b16 %v358
  %v673 = vunpack.c.l.b16 %v362
  %v674 = vunpack.c.l.b16 %v366
  %v675 = vunpack.c.l.b16 %v370
  %v676 = vunpack.c.l.b16 %v374
  %v677 = vunpack.c.l.b16 %v378
  %v678 = vunpack.c.l.b16 %v382
  %v679 = vunpack.c.l.b16 %v386
  %v680 = vpack.c.b16 %v673, %v672
  %v681 = vpack.c.b16 %v675, %v674
  %v682 = vpack.c.b16 %v677, %v676
  %v683 = vpack.c.b16 %v679, %v678
  %684 = vrot.lane.b32.xlu0 %v680, 32
  %v685 = vpop.permute.xlu0 %684
  %686 = vrot.lane.b32.xlu0 %v681, 32
  %v687 = vpop.permute.xlu0 %686
  %688 = vrot.lane.b32.xlu0 %v682, 32
  %v689 = vpop.permute.xlu0 %688
  %690 = vrot.lane.b32.xlu0 %v683, 32
  %v691 = vpop.permute.xlu0 %690
  %v700 = vunpack.c.l.b16 %v388
  %v701 = vunpack.c.l.b16 %v389
  %v702 = vunpack.c.l.b16 %v390
  %v703 = vunpack.c.l.b16 %v391
  %v704 = vunpack.c.l.b16 %v392
  %v705 = vunpack.c.l.b16 %v393
  %v706 = vunpack.c.l.b16 %v394
  %v707 = vunpack.c.l.b16 %v395
  %v708 = vpack.c.b16 %v701, %v700
  %v709 = vpack.c.b16 %v703, %v702
  %v710 = vpack.c.b16 %v705, %v704
  %v711 = vpack.c.b16 %v707, %v706
  %712 = vrot.lane.b32.xlu0 %v708, 64
  %v713 = vpop.permute.xlu0 %712
  %714 = vrot.lane.b32.xlu0 %v709, 64
  %v715 = vpop.permute.xlu0 %714
  %716 = vrot.lane.b32.xlu0 %v710, 64
  %v717 = vpop.permute.xlu0 %716
  %718 = vrot.lane.b32.xlu0 %v711, 64
  %v719 = vpop.permute.xlu0 %718
  %v720 = vunpack.c.l.b16 %v417
  %v721 = vunpack.c.l.b16 %v431
  %v722 = vunpack.c.l.b16 %v445
  %v723 = vunpack.c.l.b16 %v459
  %v724 = vunpack.c.l.b16 %v473
  %v725 = vunpack.c.l.b16 %v487
  %v726 = vunpack.c.l.b16 %v501
  %v727 = vunpack.c.l.b16 %v515
  %v728 = vpack.c.b16 %v721, %v720
  %v729 = vpack.c.b16 %v723, %v722
  %v730 = vpack.c.b16 %v725, %v724
  %v731 = vpack.c.b16 %v727, %v726
  %732 = vrot.lane.b32.xlu0 %v728, 96
  %v733 = vpop.permute.xlu0 %732
  %734 = vrot.lane.b32.xlu0 %v729, 96
  %v735 = vpop.permute.xlu0 %734
  %736 = vrot.lane.b32.xlu0 %v730, 96
  %v737 = vpop.permute.xlu0 %736
  %738 = vrot.lane.b32.xlu0 %v731, 96
  %v739 = vpop.permute.xlu0 %738
  %v740 = vunpack.c.l.b16 %v543
  %v741 = vunpack.c.l.b16 %v547
  %v742 = vunpack.c.l.b16 %v551
  %v743 = vunpack.c.l.b16 %v555
  %v744 = vunpack.c.l.b16 %v559
  %v745 = vunpack.c.l.b16 %v563
  %v746 = vunpack.c.l.b16 %v567
  %v747 = vunpack.c.l.b16 %v571
  %v748 = vpack.c.b16 %v741, %v740
  %v749 = vpack.c.b16 %v743, %v742
  %v750 = vpack.c.b16 %v745, %v744
  %v751 = vpack.c.b16 %v747, %v746
  %vm752 = vcmask 261120
  %v755 = vsel %vm752, %v588, %v605
  %v758 = vsel %vm752, %v589, %v607
  %v761 = vsel %vm752, %v590, %v609
  %v764 = vsel %vm752, %v591, %v611
  %vm765 = vcmask 523264
  %v767 = vsel %vm765, %v755, %v625
  %v769 = vsel %vm765, %v758, %v627
  %v771 = vsel %vm765, %v761, %v629
  %v773 = vsel %vm765, %v764, %v631
  %vm774 = vcmask 785408
  %v776 = vsel %vm774, %v767, %v653
  %v779 = vsel %vm774, %v769, %v655
  %v782 = vsel %vm774, %v771, %v657
  %v785 = vsel %vm774, %v773, %v659
  %v789 = vsel %vm752, %v668, %v685
  %v792 = vsel %vm752, %v669, %v687
  %v795 = vsel %vm752, %v670, %v689
  %v798 = vsel %vm752, %v671, %v691
  %v800 = vsel %vm765, %v789, %v713
  %v802 = vsel %vm765, %v792, %v715
  %v804 = vsel %vm765, %v795, %v717
  %v806 = vsel %vm765, %v798, %v719
  %v808 = vsel %vm774, %v800, %v733
  %v811 = vsel %vm774, %v802, %v735
  %v814 = vsel %vm774, %v804, %v737
  %v817 = vsel %vm774, %v806, %v739
  %v819 = vld [vmem:[%s1] sm:$0xf]
  %v820 = vld [vmem:[%s1 + $0x4] sm:$0xf]
  %v821 = vld [vmem:[%s1 + $0x8] sm:$0xf]
  %v822 = vld [vmem:[%s1 + $0xc] sm:$0xf]
  %v823 = vld [vmem:[%s1 + $0x10] sm:$0xf]
  %v824 = vld [vmem:[%s1 + $0x14] sm:$0xf]
  %v825 = vld [vmem:[%s1 + $0x18] sm:$0xf]
  %v826 = vld [vmem:[%s1 + $0x1c] sm:$0xf]
  %v827 = vld [vmem:[%s1 + $0x20] sm:$0xf]
  %v828 = vld [vmem:[%s1 + $0x24] sm:$0xf]
  %v829 = vld [vmem:[%s1 + $0x28] sm:$0xf]
  %v830 = vld [vmem:[%s1 + $0x2c] sm:$0xf]
  %v831 = vld [vmem:[%s1 + $0x30] sm:$0xf]
  %v832 = vld [vmem:[%s1 + $0x34] sm:$0xf]
  %v833 = vld [vmem:[%s1 + $0x38] sm:$0xf]
  %v834 = vld [vmem:[%s1 + $0x3c] sm:$0xf]
  %v835 = vld [vmem:[%s1 + $0x40] sm:$0xf]
  %v836 = vld [vmem:[%s1 + $0x44] sm:$0xf]
  %v837 = vld [vmem:[%s1 + $0x48] sm:$0xf]
  %v838 = vld [vmem:[%s1 + $0x4c] sm:$0xf]
  %v839 = vld [vmem:[%s1 + $0x50] sm:$0xf]
  %v840 = vld [vmem:[%s1 + $0x54] sm:$0xf]
  %v841 = vld [vmem:[%s1 + $0x58] sm:$0xf]
  %v842 = vld [vmem:[%s1 + $0x5c] sm:$0xf]
  %v843 = vld [vmem:[%s1 + $0x60] sm:$0xf]
  %v844 = vld [vmem:[%s1 + $0x64] sm:$0xf]
  %v845 = vld [vmem:[%s1 + $0x68] sm:$0xf]
  %v846 = vld [vmem:[%s1 + $0x6c] sm:$0xf]
  %v847 = vld [vmem:[%s1 + $0x70] sm:$0xf]
  %v848 = vld [vmem:[%s1 + $0x74] sm:$0xf]
  %v849 = vld [vmem:[%s1 + $0x78] sm:$0xf]
  %v850 = vld [vmem:[%s1 + $0x7c] sm:$0xf]
  %v851 = vld [vmem:[%s1 + $0x80] sm:$0xf]
  %v852 = vld [vmem:[%s1 + $0x84] sm:$0xf]
  %v853 = vld [vmem:[%s1 + $0x88] sm:$0xf]
  %v854 = vld [vmem:[%s1 + $0x8c] sm:$0xf]
  %v891 = vunpack.c.l.b16 %v819
  %v892 = vunpack.c.l.b16 %v820
  %v893 = vunpack.c.l.b16 %v821
  %v894 = vunpack.c.l.b16 %v822
  %v895 = vunpack.c.l.b16 %v823
  %v896 = vunpack.c.l.b16 %v824
  %v897 = vunpack.c.l.b16 %v825
  %v898 = vunpack.c.l.b16 %v826
  %v899 = vunpack.c.l.b16 %v827
  %v900 = vunpack.c.l.b16 %v828
  %v901 = vunpack.c.l.b16 %v829
  %v902 = vunpack.c.l.b16 %v830
  %v903 = vunpack.c.l.b16 %v831
  %v904 = vunpack.c.l.b16 %v832
  %v905 = vunpack.c.l.b16 %v833
  %v906 = vunpack.c.l.b16 %v834
  %v907 = vunpack.c.l.b16 %v835
  %v908 = vunpack.c.l.b16 %v836
  %v909 = vunpack.c.l.b16 %v837
  %v910 = vunpack.c.l.b16 %v838
  %v911 = vunpack.c.l.b16 %v839
  %v912 = vunpack.c.l.b16 %v840
  %v913 = vunpack.c.l.b16 %v841
  %v914 = vunpack.c.l.b16 %v842
  %v915 = vunpack.c.l.b16 %v843
  %v916 = vunpack.c.l.b16 %v844
  %v917 = vunpack.c.l.b16 %v845
  %v918 = vunpack.c.l.b16 %v846
  %v919 = vunpack.c.l.b16 %v847
  %v920 = vunpack.c.l.b16 %v848
  %v921 = vunpack.c.l.b16 %v849
  %v922 = vunpack.c.l.b16 %v850
  %v923 = vunpack.c.l.b16 %v851
  %v924 = vunpack.c.l.b16 %v852
  %v925 = vunpack.c.l.b16 %v853
  %v926 = vunpack.c.l.b16 %v854
  %v927 = vpack.c.b16 %v892, %v891
  %v928 = vpack.c.b16 %v894, %v893
  %v929 = vpack.c.b16 %v896, %v895
  %v930 = vpack.c.b16 %v898, %v897
  %v931 = vpack.c.b16 %v900, %v899
  %v932 = vpack.c.b16 %v902, %v901
  %v933 = vpack.c.b16 %v904, %v903
  %v934 = vpack.c.b16 %v906, %v905
  %v935 = vpack.c.b16 %v908, %v907
  %v936 = vpack.c.b16 %v910, %v909
  %v937 = vpack.c.b16 %v912, %v911
  %v938 = vpack.c.b16 %v914, %v913
  %v939 = vpack.c.b16 %v916, %v915
  %v940 = vpack.c.b16 %v918, %v917
  %v941 = vpack.c.b16 %v920, %v919
  %v942 = vpack.c.b16 %v922, %v921
  %v943 = vpack.c.b16 %v924, %v923
  %v944 = vpack.c.b16 %v926, %v925
  %v964 = vsel %vm752, %v748, 0
  %v967 = vsel %vm752, %v749, 0
  %v970 = vsel %vm752, %v750, 0
  %v973 = vsel %vm752, %v751, 0
  %975 = vmatprep.subr.bf16.mxu0 0
  %976 = vmatpush1.bf16.msra.mxu0 %v927
  %977 = vmatprep.subr.bf16.mxu0 0
  %978 = vmatpush1.bf16.msra.mxu0 %v928
  %979 = vmatprep.subr.bf16.mxu0 0
  %980 = vmatpush1.bf16.msra.mxu0 %v929
  %981 = vmatprep.subr.bf16.mxu0 0
  %982 = vmatpush1.bf16.msra.mxu0 %v930
  %983 = vmatprep.subr.bf16.mxu0 0
  %984 = vmatpush1.bf16.msra.mxu0 %v931
  %985 = vmatprep.subr.bf16.mxu0 0
  %986 = vmatpush1.bf16.msra.mxu0 %v932
  %987 = vmatprep.subr.bf16.mxu0 0
  %988 = vmatpush1.bf16.msra.mxu0 %v933
  %989 = vmatprep.subr.bf16.mxu0 0
  %990 = vmatpush1.bf16.msra.mxu0 %v934
  %991 = vmatprep.subr.bf16.mxu0 0
  %992 = vmatpush1.bf16.msra.mxu0 %v935
  %993 = vmatprep.subr.bf16.mxu0 0
  %994 = vmatpush1.bf16.msra.mxu0 %v936
  %995 = vmatprep.subr.bf16.mxu0 0
  %996 = vmatpush1.bf16.msra.mxu0 %v937
  %997 = vmatprep.subr.bf16.mxu0 0
  %998 = vmatpush1.bf16.msra.mxu0 %v938
  %999 = vmatprep.subr.bf16.mxu0 0
  %1000 = vmatpush1.bf16.msra.mxu0 %v939
  %1001 = vmatprep.subr.bf16.mxu0 0
  %1002 = vmatpush1.bf16.msra.mxu0 %v940
  %1003 = vmatprep.subr.bf16.mxu0 0
  %1004 = vmatpush1.bf16.msra.mxu0 %v941
  %1005 = vmatprep.subr.bf16.mxu0 0
  %1006 = vmatpush1.bf16.msra.mxu0 %v942
  %1007 = vmatprep.mubr.bf16.mxu0 %v808
  %1008 = vmatmul.mubr.bf16.gmra.mrb[0].mxu0 %v776
  %v1009 = vpop.f32.mrb[0].mxu0
  %v1010 = vadd.f32 0.0, %v1009
  %v1011 = vpop.f32.mrb[0].mxu0
  %v1012 = vpop.f32.mrb[0].mxu0
  %v1013 = vadd.f32 0.0, %v1012
  %v1014 = vpop.f32.mrb[0].mxu0
  %1015 = vmatprep.mubr.bf16.mxu0 %v811
  %1016 = vmatmul.mubr.bf16.gmra.mrb[0].mxu0 %v779
  %v1017 = vpop.f32.mrb[0].mxu0
  %v1018 = vadd.f32 0.0, %v1017
  %v1019 = vpop.f32.mrb[0].mxu0
  %v1020 = vpop.f32.mrb[0].mxu0
  %v1021 = vadd.f32 0.0, %v1020
  %v1022 = vpop.f32.mrb[0].mxu0
  %1023 = vmatprep.mubr.bf16.mxu0 %v814
  %1024 = vmatmul.mubr.bf16.gmra.mrb[0].mxu0 %v782
  %v1025 = vpop.f32.mrb[0].mxu0
  %v1026 = vadd.f32 0.0, %v1025
  %v1027 = vpop.f32.mrb[0].mxu0
  %v1028 = vpop.f32.mrb[0].mxu0
  %v1029 = vadd.f32 0.0, %v1028
  %v1030 = vpop.f32.mrb[0].mxu0
  %1031 = vmatprep.mubr.bf16.mxu0 %v817
  %1032 = vmatmul.mubr.bf16.gmra.mrb[0].mxu0 %v785
  %v1033 = vpop.f32.mrb[0].mxu0
  %v1034 = vadd.f32 0.0, %v1033
  %v1035 = vpop.f32.mrb[0].mxu0
  %v1036 = vpop.f32.mrb[0].mxu0
  %v1037 = vadd.f32 0.0, %v1036
  %v1038 = vpop.f32.mrb[0].mxu0
  %1039 = vdwg.mxu0
  %1040 = vmatprep.subr.bf16.mxu0 0
  %1041 = vmatpush1.bf16.msra.mxu0 %v943
  %1042 = vmatprep.subr.bf16.mxu0 0
  %1043 = vmatpush1.bf16.msra.mxu0 %v944
  %1044 = vmatprep.subr.bf16.mxu0 0
  %1045 = vmatpush1.bf16.msra.mxu0 0
  %1046 = vmatprep.subr.bf16.mxu0 0
  %1047 = vmatpush1.bf16.msra.mxu0 0
  %1048 = vmatprep.subr.bf16.mxu0 0
  %1049 = vmatpush1.bf16.msra.mxu0 0
  %1050 = vmatprep.subr.bf16.mxu0 0
  %1051 = vmatpush1.bf16.msra.mxu0 0
  %1052 = vmatprep.subr.bf16.mxu0 0
  %1053 = vmatpush1.bf16.msra.mxu0 0
  %1054 = vmatprep.subr.bf16.mxu0 0
  %1055 = vmatpush1.bf16.msra.mxu0 0
  %1056 = vmatprep.subr.bf16.mxu0 0
  %1057 = vmatpush1.bf16.msra.mxu0 0
  %1058 = vmatprep.subr.bf16.mxu0 0
  %1059 = vmatpush1.bf16.msra.mxu0 0
  %1060 = vmatprep.subr.bf16.mxu0 0
  %1061 = vmatpush1.bf16.msra.mxu0 0
  %1062 = vmatprep.subr.bf16.mxu0 0
  %1063 = vmatpush1.bf16.msra.mxu0 0
  %1064 = vmatprep.subr.bf16.mxu0 0
  %1065 = vmatpush1.bf16.msra.mxu0 0
  %1066 = vmatprep.subr.bf16.mxu0 0
  %1067 = vmatpush1.bf16.msra.mxu0 0
  %1068 = vmatprep.subr.bf16.mxu0 0
  %1069 = vmatpush1.bf16.msra.mxu0 0
  %1070 = vmatprep.subr.bf16.mxu0 0
  %1071 = vmatpush1.bf16.msra.mxu0 0
  %1072 = vmatprep.mubr.bf16.mxu0 0
  %1073 = vmatmul.mubr.bf16.gmra.mrb[0].mxu0 %v964
  %v1074 = vpop.f32.mrb[0].mxu0
  %v1075 = vadd.f32 %v1010, %v1074
  %v1076 = vpop.f32.mrb[0].mxu0
  %v1077 = vpop.f32.mrb[0].mxu0
  %v1078 = vadd.f32 %v1013, %v1077
  %v1079 = vpop.f32.mrb[0].mxu0
  %1080 = vmatprep.mubr.bf16.mxu0 0
  %1081 = vmatmul.mubr.bf16.gmra.mrb[0].mxu0 %v967
  %v1082 = vpop.f32.mrb[0].mxu0
  %v1083 = vadd.f32 %v1018, %v1082
  %v1084 = vpop.f32.mrb[0].mxu0
  %v1085 = vpop.f32.mrb[0].mxu0
  %v1086 = vadd.f32 %v1021, %v1085
  %v1087 = vpop.f32.mrb[0].mxu0
  %1088 = vmatprep.mubr.bf16.mxu0 0
  %1089 = vmatmul.mubr.bf16.gmra.mrb[0].mxu0 %v970
  %v1090 = vpop.f32.mrb[0].mxu0
  %v1091 = vadd.f32 %v1026, %v1090
  %v1092 = vpop.f32.mrb[0].mxu0
  %v1093 = vpop.f32.mrb[0].mxu0
  %v1094 = vadd.f32 %v1029, %v1093
  %v1095 = vpop.f32.mrb[0].mxu0
  %1096 = vmatprep.mubr.bf16.mxu0 0
  %1097 = vmatmul.mubr.bf16.gmra.mrb[0].mxu0 %v973
  %v1098 = vpop.f32.mrb[0].mxu0
  %v1099 = vadd.f32 %v1034, %v1098
  %v1100 = vpop.f32.mrb[0].mxu0
  %v1101 = vpop.f32.mrb[0].mxu0
  %v1102 = vadd.f32 %v1037, %v1101
  %v1103 = vpop.f32.mrb[0].mxu0
  %1104 = vdwg.mxu0
  %1105 = vst.msk [vmem:[%s2] sm:$0xff] %vm752, %v1075
  %1106 = vst.msk [vmem:[%s2 + $0x8] sm:$0xff] %vm752, %v1078
  %1107 = vst.msk [vmem:[%s2 + $0x10] sm:$0xff] %vm752, %v1083
  %1108 = vst.msk [vmem:[%s2 + $0x18] sm:$0xff] %vm752, %v1086
  %1109 = vst.msk [vmem:[%s2 + $0x20] sm:$0xff] %vm752, %v1091
  %1110 = vst.msk [vmem:[%s2 + $0x28] sm:$0xff] %vm752, %v1094
  %1111 = vst.msk [vmem:[%s2 + $0x30] sm:$0xff] %vm752, %v1099
  %1112 = vst.msk [vmem:[%s2 + $0x38] sm:$0xff] %vm752, %v1102
  // Predicated region
  $region10: #{tpu_custom_call.1} parent=0 // pred_check
    _
  $region11: #{tpu_custom_call.1} parent=0 // pred_check_branch
    %1114 = sbr.rel (0) target = $region13
  $region12: #{tpu_custom_call.1} parent=0 // pred_region
    _
  $region13: #{tpu_custom_call.1} parent=0 // pred_fallthru
    _
  // Predicated region
  $region14: #{tpu_custom_call.1} parent=0 // pred_check
    _
  $region15: #{tpu_custom_call.1} parent=0 // pred_check_branch
    %1116 = sbr.rel (0) target = $region17
  $region16: #{tpu_custom_call.1} parent=0 // pred_region
    _
  $region17: #{tpu_custom_call.1} parent=0 // pred_fallthru
    _

</llo_original>
